<compile_context>
chip_gen: v7x
topology: tpu7x:2x2x1
jax: 0.10.0
libtpu: 0.0.40
codegen_flags: <defaults>
</compile_context>

<pallas_src>
import functools

import jax
import jax.numpy as jnp
from jax.experimental import pallas as pl
from jax.experimental.pallas import tpu as pltpu

HIDDEN = 300
HIDDEN_PAD = 384   # 3 x 128 lanes -> unmasked vector ops for h1
OUT_PAD = 128      # lane-dense output tile; real out_size sliced off in wrapper


def mlp_kernel(x_ref, w1_ref, b1_ref, w2_ref, b2_ref, w3_ref, b3_ref, o_ref):
    # fcl1: Linear(input_size, 300 [padded 384]) -> ReLU -> (dropout = identity)
    x = x_ref[...].astype(jnp.bfloat16)
    h1 = jnp.dot(x, w1_ref[...], preferred_element_type=jnp.float32) + b1_ref[...]
    h1 = jnp.maximum(h1, 0.0)

    # fcl2: Linear(300, out [padded 128]) -> ReLU -> (dropout = identity)
    # Padded hidden lanes hit zero rows of w2; padded output lanes have zero
    # weight columns / bias -> h2 padded lanes are exactly 0.
    h2 = jnp.dot(h1.astype(jnp.bfloat16), w2_ref[...],
                 preferred_element_type=jnp.float32) + b2_ref[...]
    h2 = jnp.maximum(h2, 0.0)

    # fcl3: Linear(out, out [padded 128x128]) -> Sigmoid
    z = jnp.dot(h2.astype(jnp.bfloat16), w3_ref[...],
                preferred_element_type=jnp.float32) + b3_ref[...]
    # sigmoid(z) = 1 / (1 + exp(-z)); exp on EUP, approx reciprocal on EUP.
    o_ref[...] = pl.reciprocal(1.0 + jnp.exp(-z), approx=True)


def prepare_params(w1, b1, w2, b2, w3, b3):
    """One-time prep: PyTorch (out, in) -> kernel layout.

    Transpose, zero-pad hidden (300->384) and output (out->128) dims, cast
    weights to bf16 (MXU); biases stay f32 as (1, N) rows.  All off the per-call
    hot path.
    """
    in_size = w1.shape[1]
    out_size = w3.shape[0]

    w1t = (jnp.zeros((in_size, HIDDEN_PAD), jnp.float32)
           .at[:, :HIDDEN].set(w1.T)).astype(jnp.bfloat16)
    b1r = jnp.zeros((1, HIDDEN_PAD), jnp.float32).at[:, :HIDDEN].set(b1.reshape(1, -1))

    w2t = (jnp.zeros((HIDDEN_PAD, OUT_PAD), jnp.float32)
           .at[:HIDDEN, :out_size].set(w2.T)).astype(jnp.bfloat16)
    b2r = jnp.zeros((1, OUT_PAD), jnp.float32).at[:, :out_size].set(b2.reshape(1, -1))

    w3t = (jnp.zeros((OUT_PAD, OUT_PAD), jnp.float32)
           .at[:out_size, :out_size].set(w3.T)).astype(jnp.bfloat16)
    b3r = jnp.zeros((1, OUT_PAD), jnp.float32).at[:, :out_size].set(b3.reshape(1, -1))
    return w1t, b1r, w2t, b2r, w3t, b3r


def _round_up(n, m):
    return (n + m - 1) // m * m


@functools.partial(jax.jit, static_argnames=("out_size", "block_b"))
def mlp_forward(x, w1t, b1r, w2t, b2r, w3t, b3r, *, out_size, block_b=256):
    """x: (B, input_size) f32; params already in kernel layout (prepare_params)."""
    B, in_size = x.shape

    # Batch block: multiple of 8 sublanes, default 256 rows (256-wide MXU on
    # v6e/v7x), clamped for small batches; batch zero-padded to a block multiple.
    block_b = min(block_b, _round_up(B, 8))
    b_pad = _round_up(B, block_b)
    if b_pad != B:
        x = jnp.pad(x, ((0, b_pad - B), (0, 0)))
    grid = (b_pad // block_b,)

    def pinned(shape):
        # Same block every grid step -> DMA'd once, stays VMEM-resident.
        return pl.BlockSpec(shape, lambda i: (0, 0))

    flops = 2 * b_pad * (in_size * HIDDEN_PAD + HIDDEN_PAD * OUT_PAD + OUT_PAD * OUT_PAD)
    bytes_accessed = (x.size * 4 + w1t.size * 2 + b1r.size * 4 + w2t.size * 2
                      + b2r.size * 4 + w3t.size * 2 + b3r.size * 4
                      + b_pad * OUT_PAD * 4)

    # Block VMEM footprint: double-buffered x/out blocks + resident weights/biases
    # + f32 intermediates; x2 headroom, clamped well under v7x's 64 MiB.
    vmem_bytes = (2 * (block_b * in_size * 4 + block_b * OUT_PAD * 4)
                  + (w1t.size + w2t.size + w3t.size) * 2
                  + (b1r.size + b2r.size + b3r.size) * 4
                  + block_b * (HIDDEN_PAD + OUT_PAD) * 4)
    vmem_limit = int(min(48 << 20, max(4 << 20, 2 * vmem_bytes)))

    out = pl.pallas_call(
        mlp_kernel,
        out_shape=jax.ShapeDtypeStruct((b_pad, OUT_PAD), jnp.float32),
        grid=grid,
        in_specs=[
            pl.BlockSpec((block_b, in_size), lambda i: (i, 0)),   # x: blocked on batch
            pinned((in_size, HIDDEN_PAD)),                        # w1
            pinned((1, HIDDEN_PAD)),                              # b1
            pinned((HIDDEN_PAD, OUT_PAD)),                        # w2
            pinned((1, OUT_PAD)),                                 # b2
            pinned((OUT_PAD, OUT_PAD)),                           # w3
            pinned((1, OUT_PAD)),                                 # b3
        ],
        out_specs=pl.BlockSpec((block_b, OUT_PAD), lambda i: (i, 0)),
        compiler_params=pltpu.CompilerParams(
            dimension_semantics=("parallel",),   # shards batch grid across v7x's 2 TCs
            vmem_limit_bytes=vmem_limit),
        cost_estimate=pl.CostEstimate(
            flops=flops,
            transcendentals=b_pad * OUT_PAD,
            bytes_accessed=bytes_accessed),
    )(x, w1t, b1r, w2t, b2r, w3t, b3r)

    # Drop batch padding and the padded output lanes (they hold sigmoid(0)=0.5).
    return out[:B, :out_size]


def init_linear(key, in_features, out_features):
    """Deterministic init mimicking PyTorch nn.Linear default (uniform +/- 1/sqrt(in))."""
    kw, kb = jax.random.split(key)
    bound = 1.0 / jnp.sqrt(float(in_features))
    w = jax.random.uniform(kw, (out_features, in_features), jnp.float32,
                           minval=-bound, maxval=bound)
    b = jax.random.uniform(kb, (out_features,), jnp.float32,
                           minval=-bound, maxval=bound)
    return w, b


if __name__ == "__main__":
    input_size = 32
    output_size = 16
    batch = 8

    key = jax.random.PRNGKey(0)
    kx, k1, k2, k3 = jax.random.split(key, 4)

    x = jax.random.normal(kx, (batch, input_size), jnp.float32)
    w1, b1 = init_linear(k1, input_size, HIDDEN)
    w2, b2 = init_linear(k2, HIDDEN, output_size)
    w3, b3 = init_linear(k3, output_size, output_size)

    # One-time layout prep (outside the hot path).
    params = prepare_params(w1, b1, w2, b2, w3, b3)
    params = jax.block_until_ready(params)

    out = mlp_forward(x, *params, out_size=output_size)
    jax.block_until_ready(out)

    # Reference (eval-mode dropout = identity), mirroring the bf16 matmul dtype.
    xb = x.astype(jnp.bfloat16)
    h1 = jnp.maximum(jnp.dot(xb, w1.T.astype(jnp.bfloat16),
                             preferred_element_type=jnp.float32) + b1, 0.0)
    h2 = jnp.maximum(jnp.dot(h1.astype(jnp.bfloat16), w2.T.astype(jnp.bfloat16),
                             preferred_element_type=jnp.float32) + b2, 0.0)
    z = jnp.dot(h2.astype(jnp.bfloat16), w3.T.astype(jnp.bfloat16),
                preferred_element_type=jnp.float32) + b3
    ref = jax.nn.sigmoid(z)

    assert out.shape == (batch, output_size)
    assert jnp.allclose(out, ref, atol=1e-2, rtol=1e-2), float(jnp.max(jnp.abs(out - ref)))

    print("KERNEL_OK")
</pallas_src>

<mosaic_0001>
module attributes {stable_mosaic.version = 11 : i64} {
  func.func @mlp_kernel(%arg0: i32, %arg1: memref<8x32xf32, #tpu.memory_space<vmem>>, %arg2: memref<32x384xbf16, #tpu.memory_space<vmem>>, %arg3: memref<1x384xf32, #tpu.memory_space<vmem>>, %arg4: memref<384x128xbf16, #tpu.memory_space<vmem>>, %arg5: memref<1x128xf32, #tpu.memory_space<vmem>>, %arg6: memref<128x128xbf16, #tpu.memory_space<vmem>>, %arg7: memref<1x128xf32, #tpu.memory_space<vmem>>, %arg8: memref<8x128xf32, #tpu.memory_space<vmem>>) attributes {dimension_semantics = [#tpu.dimension_semantics<parallel>], iteration_bounds = array<i64: 1>, scalar_prefetch = 0 : i64, scratch_operands = 0 : i64, tpu.core_type = #tpu.core_type<tc>, window_params = [{transform_indices = @transform_0, window_bounds = array<i64: 8, 32>}, {pipeline_mode = #tpu.pipeline_mode<synchronous>, transform_indices = @transform_1, window_bounds = array<i64: 32, 384>}, {pipeline_mode = #tpu.pipeline_mode<synchronous>, transform_indices = @transform_2, window_bounds = array<i64: 1, 384>}, {pipeline_mode = #tpu.pipeline_mode<synchronous>, transform_indices = @transform_3, window_bounds = array<i64: 384, 128>}, {pipeline_mode = #tpu.pipeline_mode<synchronous>, transform_indices = @transform_4, window_bounds = array<i64: 1, 128>}, {pipeline_mode = #tpu.pipeline_mode<synchronous>, transform_indices = @transform_5, window_bounds = array<i64: 128, 128>}, {pipeline_mode = #tpu.pipeline_mode<synchronous>, transform_indices = @transform_6, window_bounds = array<i64: 1, 128>}, {transform_indices = @transform_7, window_bounds = array<i64: 8, 128>}]} {
    %c0 = arith.constant 0 : index
    %c0_0 = arith.constant 0 : index
    %0 = vector.load %arg1[%c0, %c0_0] : memref<8x32xf32, #tpu.memory_space<vmem>>, vector<8x32xf32>
    %1 = arith.truncf %0 : vector<8x32xf32> to vector<8x32xbf16>
    %c0_1 = arith.constant 0 : index
    %c0_2 = arith.constant 0 : index
    %2 = vector.load %arg2[%c0_1, %c0_2] : memref<32x384xbf16, #tpu.memory_space<vmem>>, vector<32x384xbf16>
    %cst = arith.constant dense<0.000000e+00> : vector<8x384xf32>
    %3 = tpu.matmul %1, %2, %cst {dimension_numbers = #tpu.dot_dimension_numbers<[1], [0], [0], [1], [0, 0, 1, 1], [], []>} : vector<8x32xbf16>, vector<32x384xbf16>, vector<8x384xf32> -> vector<8x384xf32>
    %c0_3 = arith.constant 0 : index
    %c0_4 = arith.constant 0 : index
    %4 = vector.load %arg3[%c0_3, %c0_4] : memref<1x384xf32, #tpu.memory_space<vmem>>, vector<1x384xf32>
    %5 = vector.broadcast %4 : vector<1x384xf32> to vector<8x384xf32>
    %6 = arith.addf %3, %5 : vector<8x384xf32>
    %cst_5 = arith.constant 0.000000e+00 : f32
    %7 = vector.broadcast %cst_5 : f32 to vector<8x384xf32>
    %8 = arith.maximumf %6, %7 : vector<8x384xf32>
    %9 = arith.truncf %8 : vector<8x384xf32> to vector<8x384xbf16>
    %c0_6 = arith.constant 0 : index
    %c0_7 = arith.constant 0 : index
    %10 = vector.load %arg4[%c0_6, %c0_7] : memref<384x128xbf16, #tpu.memory_space<vmem>>, vector<384x128xbf16>
    %cst_8 = arith.constant dense<0.000000e+00> : vector<8x128xf32>
    %11 = tpu.matmul %9, %10, %cst_8 {dimension_numbers = #tpu.dot_dimension_numbers<[1], [0], [0], [1], [0, 0, 1, 1], [], []>} : vector<8x384xbf16>, vector<384x128xbf16>, vector<8x128xf32> -> vector<8x128xf32>
    %c0_9 = arith.constant 0 : index
    %c0_10 = arith.constant 0 : index
    %12 = vector.load %arg5[%c0_9, %c0_10] : memref<1x128xf32, #tpu.memory_space<vmem>>, vector<1x128xf32>
    %13 = vector.broadcast %12 : vector<1x128xf32> to vector<8x128xf32>
    %14 = arith.addf %11, %13 : vector<8x128xf32>
    %cst_11 = arith.constant 0.000000e+00 : f32
    %15 = vector.broadcast %cst_11 : f32 to vector<8x128xf32>
    %16 = arith.maximumf %14, %15 : vector<8x128xf32>
    %17 = arith.truncf %16 : vector<8x128xf32> to vector<8x128xbf16>
    %c0_12 = arith.constant 0 : index
    %c0_13 = arith.constant 0 : index
    %18 = vector.load %arg6[%c0_12, %c0_13] : memref<128x128xbf16, #tpu.memory_space<vmem>>, vector<128x128xbf16>
    %cst_14 = arith.constant dense<0.000000e+00> : vector<8x128xf32>
    %19 = tpu.matmul %17, %18, %cst_14 {dimension_numbers = #tpu.dot_dimension_numbers<[1], [0], [0], [1], [0, 0, 1, 1], [], []>} : vector<8x128xbf16>, vector<128x128xbf16>, vector<8x128xf32> -> vector<8x128xf32>
    %c0_15 = arith.constant 0 : index
    %c0_16 = arith.constant 0 : index
    %20 = vector.load %arg7[%c0_15, %c0_16] : memref<1x128xf32, #tpu.memory_space<vmem>>, vector<1x128xf32>
    %21 = vector.broadcast %20 : vector<1x128xf32> to vector<8x128xf32>
    %22 = arith.addf %19, %21 : vector<8x128xf32>
    %cst_17 = arith.constant 0.000000e+00 : f32
    %23 = vector.broadcast %cst_17 : f32 to vector<8x128xf32>
    %24 = arith.subf %23, %22 : vector<8x128xf32>
    %25 = math.exp %24 : vector<8x128xf32>
    %cst_18 = arith.constant 1.000000e+00 : f32
    %26 = vector.broadcast %cst_18 : f32 to vector<8x128xf32>
    %27 = arith.addf %26, %25 : vector<8x128xf32>
    %28 = tpu.reciprocal %27 {approx = true} : vector<8x128xf32> -> vector<8x128xf32>
    %c0_19 = arith.constant 0 : index
    %c0_20 = arith.constant 0 : index
    %29 = vector.load %arg8[%c0_19, %c0_20] : memref<8x128xf32, #tpu.memory_space<vmem>>, vector<8x128xf32>
    tpu.vector_store %arg8[%c0_19, %c0_20], %28 {strides = array<i32>} : memref<8x128xf32, #tpu.memory_space<vmem>>, vector<8x128xf32>,
    return
  }
  func.func @transform_0(%arg0: i32) -> (i32, i32) {
    %c0_i32 = arith.constant 0 : i32
    %c0_i32_0 = arith.constant 0 : i32
    return %arg0, %c0_i32 : i32, i32
  }
  func.func @transform_1(%arg0: i32) -> (i32, i32) {
    %c0_i32 = arith.constant 0 : i32
    %c0_i32_0 = arith.constant 0 : i32
    %c0_i32_1 = arith.constant 0 : i32
    return %c0_i32, %c0_i32_0 : i32, i32
  }
  func.func @transform_2(%arg0: i32) -> (i32, i32) {
    %c0_i32 = arith.constant 0 : i32
    %c0_i32_0 = arith.constant 0 : i32
    %c0_i32_1 = arith.constant 0 : i32
    return %c0_i32, %c0_i32_0 : i32, i32
  }
  func.func @transform_3(%arg0: i32) -> (i32, i32) {
    %c0_i32 = arith.constant 0 : i32
    %c0_i32_0 = arith.constant 0 : i32
    %c0_i32_1 = arith.constant 0 : i32
    return %c0_i32, %c0_i32_0 : i32, i32
  }
  func.func @transform_4(%arg0: i32) -> (i32, i32) {
    %c0_i32 = arith.constant 0 : i32
    %c0_i32_0 = arith.constant 0 : i32
    %c0_i32_1 = arith.constant 0 : i32
    return %c0_i32, %c0_i32_0 : i32, i32
  }
  func.func @transform_5(%arg0: i32) -> (i32, i32) {
    %c0_i32 = arith.constant 0 : i32
    %c0_i32_0 = arith.constant 0 : i32
    %c0_i32_1 = arith.constant 0 : i32
    return %c0_i32, %c0_i32_0 : i32, i32
  }
  func.func @transform_6(%arg0: i32) -> (i32, i32) {
    %c0_i32 = arith.constant 0 : i32
    %c0_i32_0 = arith.constant 0 : i32
    %c0_i32_1 = arith.constant 0 : i32
    return %c0_i32, %c0_i32_0 : i32, i32
  }
  func.func @transform_7(%arg0: i32) -> (i32, i32) {
    %c0_i32 = arith.constant 0 : i32
    %c0_i32_0 = arith.constant 0 : i32
    return %arg0, %c0_i32 : i32, i32
  }
}

</mosaic_0001>

<llo_original>
// kernel: mlp_forward.1
$region0: #{mlp_forward.1}
  #allocation0 [shape = 'u32[]', space=smem, size = 0x4, offset = 0x4, fixed_abs, tag = 'smem constant byte address 0x4 - core index']
  #allocation1 [shape = 'u32[144,128]{1,0:T(1,128)}', space=vmem, size = 0x12000, scoped, tag = 'internal scratch']
  %s0 = inlined_call_operand.hbm [shape: f32[8,32], index: 0, kind: input, shape index: {}]
  %s1 = inlined_call_operand.hbm [shape: bf16[32,384], index: 1, kind: input, shape index: {}]
  %s2 = inlined_call_operand.vmem [shape: f32[1,384], index: 2, kind: input, shape index: {}]
  %s3 = inlined_call_operand.hbm [shape: bf16[384,128], index: 3, kind: input, shape index: {}]
  %s4 = inlined_call_operand.vmem [shape: f32[1,128], index: 4, kind: input, shape index: {}]
  %s5 = inlined_call_operand.hbm [shape: bf16[128,128], index: 5, kind: input, shape index: {}]
  %s6 = inlined_call_operand.vmem [shape: f32[1,128], index: 6, kind: input, shape index: {}]
  %s7 = inlined_call_operand.hbm [shape: f32[8,128], index: 7, kind: output, shape index: {}]
  %s8 = sld [smem:[#allocation0]]
  $region54: #{mlp_forward.1} parent=0
    _
  %s10 = ssub.s32 1, %s8
  %s11 = scalar_select 0, %s10, %s8
  $region1: #{mlp_forward.1} parent=0
    #allocation2 [shape = 'u8[4096]{0}', space=vmem, size = 0x1000, scoped, tag = 'input window, operand 0, single buffered']
    #allocation3 [shape = 's32[1]{0}', space=sflag, size = 0x4, scoped, tag = 'scoped memory for mlp_forward.1']
    #allocation4 [shape = 's32[1]{0}', space=sflag, size = 0x4, scoped, tag = 'scoped memory for mlp_forward.1']
    #allocation5 [shape = 'u8[24576]{0}', space=vmem, size = 0x6000, scoped, tag = 'input window, operand 1, single buffered']
    #allocation6 [shape = 's32[1]{0}', space=sflag, size = 0x4, scoped, tag = 'scoped memory for mlp_forward.1']
    #allocation7 [shape = 'u8[98304]{0}', space=vmem, size = 0x18000, scoped, tag = 'input window, operand 3, single buffered']
    #allocation8 [shape = 'u8[32768]{0}', space=vmem, size = 0x8000, scoped, tag = 'input window, operand 5, single buffered']
    #allocation9 [shape = 's32[1]{0}', space=sflag, size = 0x4, scoped, tag = 'scoped memory for mlp_forward.1']
    #allocation10 [shape = 'u8[4096]{0}', space=vmem, size = 0x1000, scoped, tag = 'output window, operand 0, single buffered']
    %12 = vsyncpa [#allocation3], 0
    %13 = vsyncpa [#allocation6], 0
    %14 = vsyncpa [#allocation9], 0
    %15 = vsyncpa [#allocation4], 0
    // Predicated region
    $region2: #{mlp_forward.1} parent=1 // pred_check
      _
    $region3: #{mlp_forward.1} parent=1 // pred_check_branch
      %17 = sbr.rel (0) target = $region5
    $region4: #{mlp_forward.1} parent=1 // pred_region
      %s19 = ssub.s32 128, 128
      %20 = vsyncadd [#allocation3], %s19
      %s22 = sshll.u32 [#allocation2], 4
      %s23 = int_to_ptr.vmem [resolvable:$true] %s22
      %25 = dma.hbm_to_vmem [thread:$0]  %s0, 128, %s23, [#allocation3]
    $region5: #{mlp_forward.1} parent=1 // pred_fallthru
      _
    // Predicated region
    $region6: #{mlp_forward.1} parent=1 // pred_check
      _
    $region7: #{mlp_forward.1} parent=1 // pred_check_branch
      %27 = sbr.rel (0) target = $region9
    $region8: #{mlp_forward.1} parent=1 // pred_region
      %s29 = ssub.s32 768, 768
      %30 = vsyncadd [#allocation6], %s29
      %s31 = sshll.u32 [#allocation5], 4
      %s32 = int_to_ptr.vmem [resolvable:$true] %s31
      %37 = dma.hbm_to_vmem [thread:$0]  %s1, 768, %s32, [#allocation6], 192, 192, 12
    $region9: #{mlp_forward.1} parent=1 // pred_fallthru
      _
    // Predicated region
    $region10: #{mlp_forward.1} parent=1 // pred_check
      _
    $region11: #{mlp_forward.1} parent=1 // pred_check_branch
      %39 = sbr.rel (0) target = $region13
    $region12: #{mlp_forward.1} parent=1 // pred_region
      _
    $region13: #{mlp_forward.1} parent=1 // pred_fallthru
      _
    // Predicated region
    $region14: #{mlp_forward.1} parent=1 // pred_check
      _
    $region15: #{mlp_forward.1} parent=1 // pred_check_branch
      %41 = sbr.rel (0) target = $region17
    $region16: #{mlp_forward.1} parent=1 // pred_region
      %s43 = ssub.s32 3072, 3072
      %44 = vsyncadd [#allocation6], %s43
      %s45 = sshll.u32 [#allocation7], 4
      %s46 = int_to_ptr.vmem [resolvable:$true] %s45
      %51 = dma.hbm_to_vmem [thread:$0]  %s3, 3072, %s46, [#allocation6], 64, 64, 4
    $region17: #{mlp_forward.1} parent=1 // pred_fallthru
      _
    // Predicated region
    $region18: #{mlp_forward.1} parent=1 // pred_check
      _
    $region19: #{mlp_forward.1} parent=1 // pred_check_branch
      %53 = sbr.rel (0) target = $region21
    $region20: #{mlp_forward.1} parent=1 // pred_region
      _
    $region21: #{mlp_forward.1} parent=1 // pred_fallthru
      _
    // Predicated region
    $region22: #{mlp_forward.1} parent=1 // pred_check
      _
    $region23: #{mlp_forward.1} parent=1 // pred_check_branch
      %55 = sbr.rel (0) target = $region25
    $region24: #{mlp_forward.1} parent=1 // pred_region
      %s57 = ssub.s32 1024, 1024
      %58 = vsyncadd [#allocation9], %s57
      %s59 = sshll.u32 [#allocation8], 4
      %s60 = int_to_ptr.vmem [resolvable:$true] %s59
      %65 = dma.hbm_to_vmem [thread:$0]  %s5, 1024, %s60, [#allocation9], 64, 64, 4
    $region25: #{mlp_forward.1} parent=1 // pred_fallthru
      _
    // Predicated region
    $region26: #{mlp_forward.1} parent=1 // pred_check
      _
    $region27: #{mlp_forward.1} parent=1 // pred_check_branch
      %67 = sbr.rel (0) target = $region29
    $region28: #{mlp_forward.1} parent=1 // pred_region
      _
    $region29: #{mlp_forward.1} parent=1 // pred_fallthru
      _
    // Predicated region
    $region30: #{mlp_forward.1} parent=1 // pred_check
      _
    $region31: #{mlp_forward.1} parent=1 // pred_check_branch
      %69 = sbr.rel (0) target = $region33
    $region32: #{mlp_forward.1} parent=1 // pred_region
      %70 = dma.done [#allocation3], 128
    $region33: #{mlp_forward.1} parent=1 // pred_fallthru
      _
    // Predicated region
    $region34: #{mlp_forward.1} parent=1 // pred_check
      _
    $region35: #{mlp_forward.1} parent=1 // pred_check_branch
      %72 = sbr.rel (0) target = $region37
    $region36: #{mlp_forward.1} parent=1 // pred_region
      %73 = dma.done [#allocation6], 768
    $region37: #{mlp_forward.1} parent=1 // pred_fallthru
      _
    // Predicated region
    $region38: #{mlp_forward.1} parent=1 // pred_check
      _
    $region39: #{mlp_forward.1} parent=1 // pred_check_branch
      %75 = sbr.rel (0) target = $region41
    $region40: #{mlp_forward.1} parent=1 // pred_region
      %76 = dma.done [#allocation6], 3072
    $region41: #{mlp_forward.1} parent=1 // pred_fallthru
      _
    // Predicated region
    $region42: #{mlp_forward.1} parent=1 // pred_check
      _
    $region43: #{mlp_forward.1} parent=1 // pred_check_branch
      %78 = sbr.rel (0) target = $region45
    $region44: #{mlp_forward.1} parent=1 // pred_region
      %79 = dma.done [#allocation9], 1024
    $region45: #{mlp_forward.1} parent=1 // pred_fallthru
      _
    %v81 = vld [vmem:[#allocation2] sm:$0xff]
    %v82 = vpack.c.bf16 %v81, %v81
    %v83 = vld [vmem:[#allocation5] sm:$0xff]
    %v84 = vld [vmem:[#allocation5 + $0x8] sm:$0xf]
    %v85 = vld [vmem:[#allocation5 + $0xc] sm:$0xff]
    %v86 = vld [vmem:[#allocation5 + $0x14] sm:$0xf]
    %v87 = vld [vmem:[#allocation5 + $0x18] sm:$0xff]
    %v88 = vld [vmem:[#allocation5 + $0x20] sm:$0xf]
    %v89 = vld [vmem:[#allocation5 + $0x24] sm:$0xff]
    %v90 = vld [vmem:[#allocation5 + $0x2c] sm:$0xf]
    %v91 = vld [vmem:[%s2] sm:$0x7]
    %v93 = vlaneseq
    %v94 = vshrl.u32 %v93, 7
    %v95 = vsub.s32 0, %v94
    %v96 = vrot.slane %v91, %v95
    %v97 = vlaneseq
    %v98 = vshrl.u32 %v97, 7
    %v99 = vsub.s32 1, %v98
    %v100 = vrot.slane %v91, %v99
    %v101 = vlaneseq
    %v102 = vshrl.u32 %v101, 7
    %v103 = vsub.s32 2, %v102
    %v104 = vrot.slane %v91, %v103
    %v116 = vunpack.c.l.b16 %v83
    %v117 = vunpack.c.h.b16 %v83
    %v118 = vunpack.c.l.b16 %v84
    %v119 = vunpack.c.l.b16 %v85
    %v120 = vunpack.c.h.b16 %v85
    %v121 = vunpack.c.l.b16 %v86
    %v122 = vunpack.c.l.b16 %v87
    %v123 = vunpack.c.h.b16 %v87
    %v124 = vunpack.c.l.b16 %v88
    %v125 = vunpack.c.l.b16 %v89
    %v126 = vunpack.c.h.b16 %v89
    %v127 = vunpack.c.l.b16 %v90
    %v128 = vpack.c.b16 %v119, %v116
    %v129 = vpack.c.b16 %v120, %v117
    %v130 = vpack.c.b16 %v121, %v118
    %v131 = vpack.c.b16 %v125, %v122
    %v132 = vpack.c.b16 %v126, %v123
    %v133 = vpack.c.b16 %v127, %v124
    %vm140 = vcmask 261120
    %v142 = vsel %vm140, %v82, 0
    %144 = vmatprep.subr.bf16.mxu0 %v129
    %145 = vmatpush1.bf16.msra.mxu0 %v128
    %146 = vmatprep.subr.bf16.mxu0 %v132
    %147 = vmatpush1.bf16.msra.mxu0 %v131
    %148 = vmatprep.subr.bf16.mxu0 0
    %149 = vmatpush1.bf16.msra.mxu0 0
    %150 = vmatprep.subr.bf16.mxu0 0
    %151 = vmatpush1.bf16.msra.mxu0 0
    %152 = vmatprep.subr.bf16.mxu0 0
    %153 = vmatpush1.bf16.msra.mxu0 0
    %154 = vmatprep.subr.bf16.mxu0 0
    %155 = vmatpush1.bf16.msra.mxu0 0
    %156 = vmatprep.subr.bf16.mxu0 0
    %157 = vmatpush1.bf16.msra.mxu0 0
    %158 = vmatprep.subr.bf16.mxu0 0
    %159 = vmatpush1.bf16.msra.mxu0 0
    %160 = vmatprep.subr.bf16.mxu0 0
    %161 = vmatpush1.bf16.msra.mxu0 0
    %162 = vmatprep.subr.bf16.mxu0 0
    %163 = vmatpush1.bf16.msra.mxu0 0
    %164 = vmatprep.subr.bf16.mxu0 0
    %165 = vmatpush1.bf16.msra.mxu0 0
    %166 = vmatprep.subr.bf16.mxu0 0
    %167 = vmatpush1.bf16.msra.mxu0 0
    %168 = vmatprep.subr.bf16.mxu0 0
    %169 = vmatpush1.bf16.msra.mxu0 0
    %170 = vmatprep.subr.bf16.mxu0 0
    %171 = vmatpush1.bf16.msra.mxu0 0
    %172 = vmatprep.subr.bf16.mxu0 0
    %173 = vmatpush1.bf16.msra.mxu0 0
    %174 = vmatprep.subr.bf16.mxu0 0
    %175 = vmatpush1.bf16.msra.mxu0 0
    %176 = vmatprep.mubr.bf16.mxu0 0
    %177 = vmatmul.mubr.bf16.gmra.mrb[0].mxu0 %v142
    %v178 = vpop.f32.mrb[0].mxu0
    %v179 = vadd.f32 %v96, %v178
    %v180 = vpop.f32.mrb[0].mxu0
    %v181 = vadd.f32 %v100, %v180
    %v182 = vpop.f32.mrb[0].mxu0
    %v183 = vpop.f32.mrb[0].mxu0
    %184 = vdwg.mxu0
    %185 = vmatprep.subr.bf16.mxu0 0
    %186 = vmatpush1.bf16.msra.mxu0 %v130
    %187 = vmatprep.subr.bf16.mxu0 0
    %188 = vmatpush1.bf16.msra.mxu0 %v133
    %189 = vmatprep.subr.bf16.mxu0 0
    %190 = vmatpush1.bf16.msra.mxu0 0
    %191 = vmatprep.subr.bf16.mxu0 0
    %192 = vmatpush1.bf16.msra.mxu0 0
    %193 = vmatprep.subr.bf16.mxu0 0
    %194 = vmatpush1.bf16.msra.mxu0 0
    %195 = vmatprep.subr.bf16.mxu0 0
    %196 = vmatpush1.bf16.msra.mxu0 0
    %197 = vmatprep.subr.bf16.mxu0 0
    %198 = vmatpush1.bf16.msra.mxu0 0
    %199 = vmatprep.subr.bf16.mxu0 0
    %200 = vmatpush1.bf16.msra.mxu0 0
    %201 = vmatprep.subr.bf16.mxu0 0
    %202 = vmatpush1.bf16.msra.mxu0 0
    %203 = vmatprep.subr.bf16.mxu0 0
    %204 = vmatpush1.bf16.msra.mxu0 0
    %205 = vmatprep.subr.bf16.mxu0 0
    %206 = vmatpush1.bf16.msra.mxu0 0
    %207 = vmatprep.subr.bf16.mxu0 0
    %208 = vmatpush1.bf16.msra.mxu0 0
    %209 = vmatprep.subr.bf16.mxu0 0
    %210 = vmatpush1.bf16.msra.mxu0 0
    %211 = vmatprep.subr.bf16.mxu0 0
    %212 = vmatpush1.bf16.msra.mxu0 0
    %213 = vmatprep.subr.bf16.mxu0 0
    %214 = vmatpush1.bf16.msra.mxu0 0
    %215 = vmatprep.subr.bf16.mxu0 0
    %216 = vmatpush1.bf16.msra.mxu0 0
    %217 = vmatprep.mubr.bf16.mxu0 0
    %218 = vmatmul.mubr.bf16.gmra.mrb[0].mxu0 %v142
    %v219 = vpop.f32.mrb[0].mxu0
    %v220 = vadd.f32 %v104, %v219
    %v221 = vpop.f32.mrb[0].mxu0
    %v222 = vpop.f32.mrb[0].mxu0
    %v223 = vpop.f32.mrb[0].mxu0
    %224 = vdwg.mxu0
    %v225 = vmax.f32 %v179, 0.0
    %v226 = vmax.f32 %v181, 0.0
    %v227 = vmax.f32 %v220, 0.0
    %v228 = vpack.c.bf16 %v225, %v225
    %v229 = vpack.c.bf16 %v226, %v226
    %v230 = vpack.c.bf16 %v227, %v227
    %v231 = vld [vmem:[#allocation7] sm:$0xf]
    %v232 = vld [vmem:[#allocation7 + $0x4] sm:$0xf]
    %v233 = vld [vmem:[#allocation7 + $0x8] sm:$0xf]
    %v234 = vld [vmem:[#allocation7 + $0xc] sm:$0xf]
    %v235 = vld [vmem:[#allocation7 + $0x10] sm:$0xf]
    %v236 = vld [vmem:[#allocation7 + $0x14] sm:$0xf]
    %v237 = vld [vmem:[#allocation7 + $0x18] sm:$0xf]
    %v238 = vld [vmem:[#allocation7 + $0x1c] sm:$0xf]
    %v239 = vld [vmem:[#allocation7 + $0x20] sm:$0xf]
    %v240 = vld [vmem:[#allocation7 + $0x24] sm:$0xf]
    %v241 = vld [vmem:[#allocation7 + $0x28] sm:$0xf]
    %v242 = vld [vmem:[#allocation7 + $0x2c] sm:$0xf]
    %v243 = vld [vmem:[#allocation7 + $0x30] sm:$0xf]
    %v244 = vld [vmem:[#allocation7 + $0x34] sm:$0xf]
    %v245 = vld [vmem:[#allocation7 + $0x38] sm:$0xf]
    %v246 = vld [vmem:[#allocation7 + $0x3c] sm:$0xf]
    %v247 = vld [vmem:[#allocation7 + $0x40] sm:$0xf]
    %v248 = vld [vmem:[#allocation7 + $0x44] sm:$0xf]
    %v249 = vld [vmem:[#allocation7 + $0x48] sm:$0xf]
    %v250 = vld [vmem:[#allocation7 + $0x4c] sm:$0xf]
    %v251 = vld [vmem:[#allocation7 + $0x50] sm:$0xf]
    %v252 = vld [vmem:[#allocation7 + $0x54] sm:$0xf]
    %v253 = vld [vmem:[#allocation7 + $0x58] sm:$0xf]
    %v254 = vld [vmem:[#allocation7 + $0x5c] sm:$0xf]
    %v255 = vld [vmem:[#allocation7 + $0x60] sm:$0xf]
    %v256 = vld [vmem:[#allocation7 + $0x64] sm:$0xf]
    %v257 = vld [vmem:[#allocation7 + $0x68] sm:$0xf]
    %v258 = vld [vmem:[#allocation7 + $0x6c] sm:$0xf]
    %v259 = vld [vmem:[#allocation7 + $0x70] sm:$0xf]
    %v260 = vld [vmem:[#allocation7 + $0x74] sm:$0xf]
    %v261 = vld [vmem:[#allocation7 + $0x78] sm:$0xf]
    %v262 = vld [vmem:[#allocation7 + $0x7c] sm:$0xf]
    %v263 = vld [vmem:[#allocation7 + $0x80] sm:$0xf]
    %v264 = vld [vmem:[#allocation7 + $0x84] sm:$0xf]
    %v265 = vld [vmem:[#allocation7 + $0x88] sm:$0xf]
    %v266 = vld [vmem:[#allocation7 + $0x8c] sm:$0xf]
    %v267 = vld [vmem:[#allocation7 + $0x90] sm:$0xf]
    %v268 = vld [vmem:[#allocation7 + $0x94] sm:$0xf]
    %v269 = vld [vmem:[#allocation7 + $0x98] sm:$0xf]
    %v270 = vld [vmem:[#allocation7 + $0x9c] sm:$0xf]
    %v271 = vld [vmem:[#allocation7 + $0xa0] sm:$0xf]
    %v272 = vld [vmem:[#allocation7 + $0xa4] sm:$0xf]
    %v273 = vld [vmem:[#allocation7 + $0xa8] sm:$0xf]
    %v274 = vld [vmem:[#allocation7 + $0xac] sm:$0xf]
    %v275 = vld [vmem:[#allocation7 + $0xb0] sm:$0xf]
    %v276 = vld [vmem:[#allocation7 + $0xb4] sm:$0xf]
    %v277 = vld [vmem:[#allocation7 + $0xb8] sm:$0xf]
    %v278 = vld [vmem:[#allocation7 + $0xbc] sm:$0xf]
    %v279 = vld [vmem:[%s4] sm:$0x1]
    %v281 = vlaneseq
    %v282 = vshrl.u32 %v281, 7
    %v283 = vsub.s32 0, %v282
    %v284 = vrot.slane %v279, %v283
    %v334 = vunpack.c.l.b16 %v231
    %v335 = vunpack.c.l.b16 %v232
    %v336 = vunpack.c.l.b16 %v233
    %v337 = vunpack.c.l.b16 %v234
    %v338 = vunpack.c.l.b16 %v235
    %v339 = vunpack.c.l.b16 %v236
    %v340 = vunpack.c.l.b16 %v237
    %v341 = vunpack.c.l.b16 %v238
    %v342 = vunpack.c.l.b16 %v239
    %v343 = vunpack.c.l.b16 %v240
    %v344 = vunpack.c.l.b16 %v241
    %v345 = vunpack.c.l.b16 %v242
    %v346 = vunpack.c.l.b16 %v243
    %v347 = vunpack.c.l.b16 %v244
    %v348 = vunpack.c.l.b16 %v245
    %v349 = vunpack.c.l.b16 %v246
    %v350 = vunpack.c.l.b16 %v247
    %v351 = vunpack.c.l.b16 %v248
    %v352 = vunpack.c.l.b16 %v249
    %v353 = vunpack.c.l.b16 %v250
    %v354 = vunpack.c.l.b16 %v251
    %v355 = vunpack.c.l.b16 %v252
    %v356 = vunpack.c.l.b16 %v253
    %v357 = vunpack.c.l.b16 %v254
    %v358 = vunpack.c.l.b16 %v255
    %v359 = vunpack.c.l.b16 %v256
    %v360 = vunpack.c.l.b16 %v257
    %v361 = vunpack.c.l.b16 %v258
    %v362 = vunpack.c.l.b16 %v259
    %v363 = vunpack.c.l.b16 %v260
    %v364 = vunpack.c.l.b16 %v261
    %v365 = vunpack.c.l.b16 %v262
    %v366 = vunpack.c.l.b16 %v263
    %v367 = vunpack.c.l.b16 %v264
    %v368 = vunpack.c.l.b16 %v265
    %v369 = vunpack.c.l.b16 %v266
    %v370 = vunpack.c.l.b16 %v267
    %v371 = vunpack.c.l.b16 %v268
    %v372 = vunpack.c.l.b16 %v269
    %v373 = vunpack.c.l.b16 %v270
    %v374 = vunpack.c.l.b16 %v271
    %v375 = vunpack.c.l.b16 %v272
    %v376 = vunpack.c.l.b16 %v273
    %v377 = vunpack.c.l.b16 %v274
    %v378 = vunpack.c.l.b16 %v275
    %v379 = vunpack.c.l.b16 %v276
    %v380 = vunpack.c.l.b16 %v277
    %v381 = vunpack.c.l.b16 %v278
    %v382 = vpack.c.b16 %v335, %v334
    %v383 = vpack.c.b16 %v337, %v336
    %v384 = vpack.c.b16 %v339, %v338
    %v385 = vpack.c.b16 %v341, %v340
    %v386 = vpack.c.b16 %v343, %v342
    %v387 = vpack.c.b16 %v345, %v344
    %v388 = vpack.c.b16 %v347, %v346
    %v389 = vpack.c.b16 %v349, %v348
    %v390 = vpack.c.b16 %v351, %v350
    %v391 = vpack.c.b16 %v353, %v352
    %v392 = vpack.c.b16 %v355, %v354
    %v393 = vpack.c.b16 %v357, %v356
    %v394 = vpack.c.b16 %v359, %v358
    %v395 = vpack.c.b16 %v361, %v360
    %v396 = vpack.c.b16 %v363, %v362
    %v397 = vpack.c.b16 %v365, %v364
    %v398 = vpack.c.b16 %v367, %v366
    %v399 = vpack.c.b16 %v369, %v368
    %v400 = vpack.c.b16 %v371, %v370
    %v401 = vpack.c.b16 %v373, %v372
    %v402 = vpack.c.b16 %v375, %v374
    %v403 = vpack.c.b16 %v377, %v376
    %v404 = vpack.c.b16 %v379, %v378
    %v405 = vpack.c.b16 %v381, %v380
    %430 = vmatprep.subr.bf16.mxu0 0
    %431 = vmatpush1.bf16.msra.mxu0 %v382
    %432 = vmatprep.subr.bf16.mxu0 0
    %433 = vmatpush1.bf16.msra.mxu0 %v383
    %434 = vmatprep.subr.bf16.mxu0 0
    %435 = vmatpush1.bf16.msra.mxu0 %v384
    %436 = vmatprep.subr.bf16.mxu0 0
    %437 = vmatpush1.bf16.msra.mxu0 %v385
    %438 = vmatprep.subr.bf16.mxu0 0
    %439 = vmatpush1.bf16.msra.mxu0 %v386
    %440 = vmatprep.subr.bf16.mxu0 0
    %441 = vmatpush1.bf16.msra.mxu0 %v387
    %442 = vmatprep.subr.bf16.mxu0 0
    %443 = vmatpush1.bf16.msra.mxu0 %v388
    %444 = vmatprep.subr.bf16.mxu0 0
    %445 = vmatpush1.bf16.msra.mxu0 %v389
    %446 = vmatprep.subr.bf16.mxu0 0
    %447 = vmatpush1.bf16.msra.mxu0 %v390
    %448 = vmatprep.subr.bf16.mxu0 0
    %449 = vmatpush1.bf16.msra.mxu0 %v391
    %450 = vmatprep.subr.bf16.mxu0 0
    %451 = vmatpush1.bf16.msra.mxu0 %v392
    %452 = vmatprep.subr.bf16.mxu0 0
    %453 = vmatpush1.bf16.msra.mxu0 %v393
    %454 = vmatprep.subr.bf16.mxu0 0
    %455 = vmatpush1.bf16.msra.mxu0 %v394
    %456 = vmatprep.subr.bf16.mxu0 0
    %457 = vmatpush1.bf16.msra.mxu0 %v395
    %458 = vmatprep.subr.bf16.mxu0 0
    %459 = vmatpush1.bf16.msra.mxu0 %v396
    %460 = vmatprep.subr.bf16.mxu0 0
    %461 = vmatpush1.bf16.msra.mxu0 %v397
    %462 = vmatprep.mubr.bf16.mxu0 %v229
    %463 = vmatmul.mubr.bf16.gmra.mrb[0].mxu0 %v228
    %v464 = vpop.f32.mrb[0].mxu0
    %v465 = vadd.f32 %v284, %v464
    %v466 = vpop.f32.mrb[0].mxu0
    %v467 = vpop.f32.mrb[0].mxu0
    %v468 = vpop.f32.mrb[0].mxu0
    %469 = vdwg.mxu0
    %470 = vmatprep.subr.bf16.mxu0 0
    %471 = vmatpush1.bf16.msra.mxu0 %v398
    %472 = vmatprep.subr.bf16.mxu0 0
    %473 = vmatpush1.bf16.msra.mxu0 %v399
    %474 = vmatprep.subr.bf16.mxu0 0
    %475 = vmatpush1.bf16.msra.mxu0 %v400
    %476 = vmatprep.subr.bf16.mxu0 0
    %477 = vmatpush1.bf16.msra.mxu0 %v401
    %478 = vmatprep.subr.bf16.mxu0 0
    %479 = vmatpush1.bf16.msra.mxu0 %v402
    %480 = vmatprep.subr.bf16.mxu0 0
    %481 = vmatpush1.bf16.msra.mxu0 %v403
    %482 = vmatprep.subr.bf16.mxu0 0
    %483 = vmatpush1.bf16.msra.mxu0 %v404
    %484 = vmatprep.subr.bf16.mxu0 0
    %485 = vmatpush1.bf16.msra.mxu0 %v405
    %486 = vmatprep.subr.bf16.mxu0 0
    %487 = vmatpush1.bf16.msra.mxu0 0
    %488 = vmatprep.subr.bf16.mxu0 0
    %489 = vmatpush1.bf16.msra.mxu0 0
    %490 = vmatprep.subr.bf16.mxu0 0
    %491 = vmatpush1.bf16.msra.mxu0 0
    %492 = vmatprep.subr.bf16.mxu0 0
    %493 = vmatpush1.bf16.msra.mxu0 0
    %494 = vmatprep.subr.bf16.mxu0 0
    %495 = vmatpush1.bf16.msra.mxu0 0
    %496 = vmatprep.subr.bf16.mxu0 0
    %497 = vmatpush1.bf16.msra.mxu0 0
    %498 = vmatprep.subr.bf16.mxu0 0
    %499 = vmatpush1.bf16.msra.mxu0 0
    %500 = vmatprep.subr.bf16.mxu0 0
    %501 = vmatpush1.bf16.msra.mxu0 0
    %502 = vmatprep.mubr.bf16.mxu0 0
    %503 = vmatmul.mubr.bf16.gmra.mrb[0].mxu0 %v230
    %v504 = vpop.f32.mrb[0].mxu0
    %v505 = vadd.f32 %v465, %v504
    %v506 = vpop.f32.mrb[0].mxu0
    %v507 = vpop.f32.mrb[0].mxu0
    %v508 = vpop.f32.mrb[0].mxu0
    %509 = vdwg.mxu0
    %v510 = vmax.f32 %v505, 0.0
    %v511 = vpack.c.bf16 %v510, %v510
    %v512 = vld [vmem:[#allocation8] sm:$0xf]
    %v513 = vld [vmem:[#allocation8 + $0x4] sm:$0xf]
    %v514 = vld [vmem:[#allocation8 + $0x8] sm:$0xf]
    %v515 = vld [vmem:[#allocation8 + $0xc] sm:$0xf]
    %v516 = vld [vmem:[#allocation8 + $0x10] sm:$0xf]
    %v517 = vld [vmem:[#allocation8 + $0x14] sm:$0xf]
    %v518 = vld [vmem:[#allocation8 + $0x18] sm:$0xf]
    %v519 = vld [vmem:[#allocation8 + $0x1c] sm:$0xf]
    %v520 = vld [vmem:[#allocation8 + $0x20] sm:$0xf]
    %v521 = vld [vmem:[#allocation8 + $0x24] sm:$0xf]
    %v522 = vld [vmem:[#allocation8 + $0x28] sm:$0xf]
    %v523 = vld [vmem:[#allocation8 + $0x2c] sm:$0xf]
    %v524 = vld [vmem:[#allocation8 + $0x30] sm:$0xf]
    %v525 = vld [vmem:[#allocation8 + $0x34] sm:$0xf]
    %v526 = vld [vmem:[#allocation8 + $0x38] sm:$0xf]
    %v527 = vld [vmem:[#allocation8 + $0x3c] sm:$0xf]
    %v528 = vld [vmem:[%s6] sm:$0x1]
    %v530 = vlaneseq
    %v531 = vshrl.u32 %v530, 7
    %v532 = vsub.s32 0, %v531
    %v533 = vrot.slane %v528, %v532
    %v551 = vunpack.c.l.b16 %v512
    %v552 = vunpack.c.l.b16 %v513
    %v553 = vunpack.c.l.b16 %v514
    %v554 = vunpack.c.l.b16 %v515
    %v555 = vunpack.c.l.b16 %v516
    %v556 = vunpack.c.l.b16 %v517
    %v557 = vunpack.c.l.b16 %v518
    %v558 = vunpack.c.l.b16 %v519
    %v559 = vunpack.c.l.b16 %v520
    %v560 = vunpack.c.l.b16 %v521
    %v561 = vunpack.c.l.b16 %v522
    %v562 = vunpack.c.l.b16 %v523
    %v563 = vunpack.c.l.b16 %v524
    %v564 = vunpack.c.l.b16 %v525
    %v565 = vunpack.c.l.b16 %v526
    %v566 = vunpack.c.l.b16 %v527
    %v567 = vpack.c.b16 %v552, %v551
    %v568 = vpack.c.b16 %v554, %v553
    %v569 = vpack.c.b16 %v556, %v555
    %v570 = vpack.c.b16 %v558, %v557
    %v571 = vpack.c.b16 %v560, %v559
    %v572 = vpack.c.b16 %v562, %v561
    %v573 = vpack.c.b16 %v564, %v563
    %v574 = vpack.c.b16 %v566, %v565
    %583 = vmatprep.subr.bf16.mxu0 0
    %584 = vmatpush1.bf16.msra.mxu0 %v567
    %585 = vmatprep.subr.bf16.mxu0 0
    %586 = vmatpush1.bf16.msra.mxu0 %v568
    %587 = vmatprep.subr.bf16.mxu0 0
    %588 = vmatpush1.bf16.msra.mxu0 %v569
    %589 = vmatprep.subr.bf16.mxu0 0
    %590 = vmatpush1.bf16.msra.mxu0 %v570
    %591 = vmatprep.subr.bf16.mxu0 0
    %592 = vmatpush1.bf16.msra.mxu0 %v571
    %593 = vmatprep.subr.bf16.mxu0 0
    %594 = vmatpush1.bf16.msra.mxu0 %v572
    %595 = vmatprep.subr.bf16.mxu0 0
    %596 = vmatpush1.bf16.msra.mxu0 %v573
    %597 = vmatprep.subr.bf16.mxu0 0
    %598 = vmatpush1.bf16.msra.mxu0 %v574
    %599 = vmatprep.subr.bf16.mxu0 0
    %600 = vmatpush1.bf16.msra.mxu0 0
    %601 = vmatprep.subr.bf16.mxu0 0
    %602 = vmatpush1.bf16.msra.mxu0 0
    %603 = vmatprep.subr.bf16.mxu0 0
    %604 = vmatpush1.bf16.msra.mxu0 0
    %605 = vmatprep.subr.bf16.mxu0 0
    %606 = vmatpush1.bf16.msra.mxu0 0
    %607 = vmatprep.subr.bf16.mxu0 0
    %608 = vmatpush1.bf16.msra.mxu0 0
    %609 = vmatprep.subr.bf16.mxu0 0
    %610 = vmatpush1.bf16.msra.mxu0 0
    %611 = vmatprep.subr.bf16.mxu0 0
    %612 = vmatpush1.bf16.msra.mxu0 0
    %613 = vmatprep.subr.bf16.mxu0 0
    %614 = vmatpush1.bf16.msra.mxu0 0
    %615 = vmatprep.mubr.bf16.mxu0 0
    %616 = vmatmul.mubr.bf16.gmra.mrb[0].mxu0 %v511
    %v617 = vpop.f32.mrb[0].mxu0
    %v618 = vadd.f32 %v533, %v617
    %v619 = vpop.f32.mrb[0].mxu0
    %v620 = vpop.f32.mrb[0].mxu0
    %v621 = vpop.f32.mrb[0].mxu0
    %622 = vdwg.mxu0
    %v623 = vsub.f32 0.0, %v618
    %v624 = vmul.f32 %v623, 1.442695
    %v625 = vpow.pop %v624
    %v626 = vadd.f32 %v625, 1.0
    %v627 = vrcp.pop %v626
    %628 = vst [vmem:[#allocation10] sm:$0xff] %v627
    // Predicated region
    $region46: #{mlp_forward.1} parent=1 // pred_check
      _
    $region47: #{mlp_forward.1} parent=1 // pred_check_branch
      %630 = sbr.rel (0) target = $region49
    $region48: #{mlp_forward.1} parent=1 // pred_region
      %s632 = ssub.s32 128, 128
      %633 = vsyncadd [#allocation4], %s632
      %s635 = sshll.u32 [#allocation10], 4
      %s636 = int_to_ptr.vmem [resolvable:$true] %s635
      %638 = dma.vmem_to_hbm [thread:$0]  %s636, 128, %s7, [#allocation4]
    $region49: #{mlp_forward.1} parent=1 // pred_fallthru
      _
    // Predicated region
    $region50: #{mlp_forward.1} parent=1 // pred_check
      _
    $region51: #{mlp_forward.1} parent=1 // pred_check_branch
      %640 = sbr.rel (0) target = $region53
    $region52: #{mlp_forward.1} parent=1 // pred_region
      %641 = dma.done [#allocation4], 128
    $region53: #{mlp_forward.1} parent=1 // pred_fallthru
      _
    %642 = vsyncpa [#allocation3], 1
    %643 = vsyncpa [#allocation6], 1
    %644 = vsyncpa [#allocation9], 1
    %645 = vsyncpa [#allocation4], 1

</llo_original>
